<compile_context>
chip_gen: v7x
topology: tpu7x:2x2x1
jax: 0.10.0
libtpu: 0.0.40
codegen_flags: <defaults>
</compile_context>

<pallas_src>
import jax
import jax.numpy as jnp
from jax.experimental import pallas as pl
from jax.experimental.pallas import tpu as pltpu

LANE = 128


def _round_up(n, m):
    return ((n + m - 1) // m) * m


def emotion_qnet_kernel(x_ref, w1_ref, w2_ref, w3_ref, w4_ref, shifts_ref, out_ref):
    """Fused MLP forward on one (TM, input_dim) batch tile.

    shifts_ref row i holds the folded BatchNorm(eval) shift for blocks 0-2 and the
    final Linear bias for row 3, each zero-padded to the widest (lane-padded) layer.
    The BN scale is already folded into the bf16 weights, so each hidden block is
    just: MXU dot (f32 accumulate) + shift add + ReLU, all elementwise math in f32.
    """
    p1 = w1_ref.shape[1]
    p2 = w2_ref.shape[1]
    p3 = w3_ref.shape[1]
    p4 = w4_ref.shape[1]
    shifts = shifts_ref[...]                       # (4, P) f32, VMEM-resident

    x = x_ref[...].astype(w1_ref.dtype)            # bf16 MXU inputs

    h = jnp.dot(x, w1_ref[...], preferred_element_type=jnp.float32)
    h = jnp.maximum(h + shifts[0:1, :p1], 0.0)     # Dropout(0.2) = identity (eval)

    h = jnp.dot(h.astype(w2_ref.dtype), w2_ref[...], preferred_element_type=jnp.float32)
    h = jnp.maximum(h + shifts[1:2, :p2], 0.0)

    h = jnp.dot(h.astype(w3_ref.dtype), w3_ref[...], preferred_element_type=jnp.float32)
    h = jnp.maximum(h + shifts[2:3, :p3], 0.0)

    q = jnp.dot(h.astype(w4_ref.dtype), w4_ref[...], preferred_element_type=jnp.float32)
    out_ref[...] = (q + shifts[3:4, :p4]).astype(out_ref.dtype)


def init_params(key, input_dim, hidden_dim, output_dim, weight_dtype=jnp.bfloat16):
    """He (kaiming_normal, fan_in, relu) init, biases = 0, BatchNorm at its PyTorch
    eval defaults (gamma=1, beta=0, running_mean=0, running_var=1, eps=1e-5).

    BN(eval) + bias is folded as:
        (x@W + b - mean) * gamma/sqrt(var+eps) + beta
      == x @ (W * scale) + shift,  scale = gamma/sqrt(var+eps), shift = beta + (b-mean)*scale
    Every layer's output dim is zero-padded to a multiple of 128 so activations and the
    output store stay lane-dense (padding is exact: padded cols are 0 and feed zero rows).
    """
    dims = [(input_dim, hidden_dim),
            (hidden_dim, hidden_dim),
            (hidden_dim, hidden_dim // 2),
            (hidden_dim // 2, output_dim)]
    padded_out = [_round_up(d_out, LANE) for _, d_out in dims]
    padded_in = [input_dim] + padded_out[:-1]
    pmax = max(padded_out)

    keys = jax.random.split(key, len(dims))
    eps = 1e-5
    weights = []
    shifts = jnp.zeros((len(dims), pmax), dtype=jnp.float32)
    for i, ((fan_in, fan_out), k) in enumerate(zip(dims, keys)):
        std = (2.0 / fan_in) ** 0.5
        w = std * jax.random.normal(k, (fan_in, fan_out), dtype=jnp.float32)
        b = jnp.zeros((fan_out,), dtype=jnp.float32)
        if i < 3:
            gamma = jnp.ones((fan_out,), jnp.float32)
            beta = jnp.zeros((fan_out,), jnp.float32)
            running_mean = jnp.zeros((fan_out,), jnp.float32)
            running_var = jnp.ones((fan_out,), jnp.float32)
            scale = gamma / jnp.sqrt(running_var + eps)
            w = w * scale[None, :]                        # fold BN scale into W
            shift = beta + (b - running_mean) * scale     # folded BN shift (+ linear bias)
        else:
            shift = b                                     # final Linear bias
        w_pad = jnp.zeros((padded_in[i], padded_out[i]), dtype=jnp.float32)
        w_pad = w_pad.at[:fan_in, :fan_out].set(w)
        weights.append(w_pad.astype(weight_dtype))
        shifts = shifts.at[i, :fan_out].set(shift)
    w1, w2, w3, w4 = weights
    return w1, w2, w3, w4, shifts


def emotion_qnet_forward(x, params, output_dim, *, block_m=512):
    w1, w2, w3, w4, shifts = params
    batch, in_dim = x.shape
    p1, p2, p3, p4 = w1.shape[1], w2.shape[1], w3.shape[1], w4.shape[1]

    # Batch tile: big enough to pipeline at large batch, padded to a sublane multiple.
    tm = min(block_m, _round_up(batch, 8))
    padded_batch = _round_up(batch, tm)
    if padded_batch != batch:
        x = jnp.pad(x, ((0, padded_batch - batch), (0, 0)))
    grid = (padded_batch // tm,)

    def resident(arr):  # weights / shifts: same block every step -> stays in VMEM
        return pl.BlockSpec(arr.shape, lambda i: (0, 0))

    flops = 2 * padded_batch * (in_dim * p1 + p1 * p2 + p2 * p3 + p3 * p4)
    bytes_accessed = (x.size * x.dtype.itemsize
                      + sum(w.size * w.dtype.itemsize for w in (w1, w2, w3, w4))
                      + shifts.size * shifts.dtype.itemsize
                      + padded_batch * p4 * 4)

    out = pl.pallas_call(
        emotion_qnet_kernel,
        out_shape=jax.ShapeDtypeStruct((padded_batch, p4), jnp.float32),
        grid=grid,
        in_specs=[
            pl.BlockSpec((tm, in_dim), lambda i: (i, 0)),   # pipelined batch tile
            resident(w1), resident(w2), resident(w3), resident(w4),
            resident(shifts),
        ],
        out_specs=pl.BlockSpec((tm, p4), lambda i: (i, 0)),  # lane-dense (128-wide) store
        compiler_params=pltpu.CompilerParams(
            dimension_semantics=("parallel",)),              # shard batch tiles across TCs (v7x)
        cost_estimate=pl.CostEstimate(
            flops=flops, transcendentals=0, bytes_accessed=bytes_accessed),
    )(x, w1, w2, w3, w4, shifts)

    return out[:batch, :output_dim]


def _reference(x, params, output_dim):
    """Pure-JAX reference of the same eval-mode, bf16-matmul / f32-accumulate math."""
    w1, w2, w3, w4, shifts = params

    def block(h, w, t):
        y = jnp.dot(h.astype(w.dtype), w, preferred_element_type=jnp.float32)
        return jnp.maximum(y + t, 0.0)

    h = block(x, w1, shifts[0:1, :w1.shape[1]])
    h = block(h, w2, shifts[1:2, :w2.shape[1]])
    h = block(h, w3, shifts[2:3, :w3.shape[1]])
    q = jnp.dot(h.astype(w4.dtype), w4, preferred_element_type=jnp.float32)
    q = q + shifts[3:4, :w4.shape[1]]
    return q[:, :output_dim]


if __name__ == "__main__":
    # Shapes consistent with the module's forward: x (batch, input_dim) -> (batch, 7).
    BATCH, INPUT_DIM, HIDDEN_DIM, OUTPUT_DIM = 8, 64, 32, 7

    key = jax.random.PRNGKey(0)
    k_params, k_x = jax.random.split(key)
    params = init_params(k_params, INPUT_DIM, HIDDEN_DIM, OUTPUT_DIM)
    x = jax.random.normal(k_x, (BATCH, INPUT_DIM), dtype=jnp.float32)

    q_values = emotion_qnet_forward(x, params, OUTPUT_DIM)
    jax.block_until_ready(q_values)

    q_ref = _reference(x, params, OUTPUT_DIM)
    assert q_values.shape == (BATCH, OUTPUT_DIM)
    assert jnp.allclose(q_values, q_ref, atol=1e-2, rtol=1e-2), \
        float(jnp.max(jnp.abs(q_values - q_ref)))

    print("KERNEL_OK")
</pallas_src>

<mosaic_0001>
module attributes {stable_mosaic.version = 11 : i64} {
  func.func @emotion_qnet_kernel(%arg0: i32, %arg1: memref<8x64xf32, #tpu.memory_space<vmem>>, %arg2: memref<64x128xbf16, #tpu.memory_space<vmem>>, %arg3: memref<128x128xbf16, #tpu.memory_space<vmem>>, %arg4: memref<128x128xbf16, #tpu.memory_space<vmem>>, %arg5: memref<128x128xbf16, #tpu.memory_space<vmem>>, %arg6: memref<4x128xf32, #tpu.memory_space<vmem>>, %arg7: memref<8x128xf32, #tpu.memory_space<vmem>>) attributes {dimension_semantics = [#tpu.dimension_semantics<parallel>], iteration_bounds = array<i64: 1>, scalar_prefetch = 0 : i64, scratch_operands = 0 : i64, tpu.core_type = #tpu.core_type<tc>, window_params = [{transform_indices = @transform_0, window_bounds = array<i64: 8, 64>}, {pipeline_mode = #tpu.pipeline_mode<synchronous>, transform_indices = @transform_1, window_bounds = array<i64: 64, 128>}, {pipeline_mode = #tpu.pipeline_mode<synchronous>, transform_indices = @transform_2, window_bounds = array<i64: 128, 128>}, {pipeline_mode = #tpu.pipeline_mode<synchronous>, transform_indices = @transform_3, window_bounds = array<i64: 128, 128>}, {pipeline_mode = #tpu.pipeline_mode<synchronous>, transform_indices = @transform_4, window_bounds = array<i64: 128, 128>}, {pipeline_mode = #tpu.pipeline_mode<synchronous>, transform_indices = @transform_5, window_bounds = array<i64: 4, 128>}, {transform_indices = @transform_6, window_bounds = array<i64: 8, 128>}]} {
    %c0 = arith.constant 0 : index
    %c0_0 = arith.constant 0 : index
    %0 = vector.load %arg6[%c0, %c0_0] : memref<4x128xf32, #tpu.memory_space<vmem>>, vector<4x128xf32>
    %c0_1 = arith.constant 0 : index
    %c0_2 = arith.constant 0 : index
    %1 = vector.load %arg1[%c0_1, %c0_2] : memref<8x64xf32, #tpu.memory_space<vmem>>, vector<8x64xf32>
    %2 = arith.truncf %1 : vector<8x64xf32> to vector<8x64xbf16>
    %c0_3 = arith.constant 0 : index
    %c0_4 = arith.constant 0 : index
    %3 = vector.load %arg2[%c0_3, %c0_4] : memref<64x128xbf16, #tpu.memory_space<vmem>>, vector<64x128xbf16>
    %cst = arith.constant dense<0.000000e+00> : vector<8x128xf32>
    %4 = tpu.matmul %2, %3, %cst {dimension_numbers = #tpu.dot_dimension_numbers<[1], [0], [0], [1], [0, 0, 1, 1], [], []>} : vector<8x64xbf16>, vector<64x128xbf16>, vector<8x128xf32> -> vector<8x128xf32>
    %5 = vector.extract_strided_slice %0 {offsets = [0, 0], sizes = [1, 128], strides = [1, 1]} : vector<4x128xf32> to vector<1x128xf32>
    %6 = vector.broadcast %5 : vector<1x128xf32> to vector<8x128xf32>
    %7 = arith.addf %4, %6 : vector<8x128xf32>
    %cst_5 = arith.constant 0.000000e+00 : f32
    %8 = vector.broadcast %cst_5 : f32 to vector<8x128xf32>
    %9 = arith.maximumf %7, %8 : vector<8x128xf32>
    %10 = arith.truncf %9 : vector<8x128xf32> to vector<8x128xbf16>
    %c0_6 = arith.constant 0 : index
    %c0_7 = arith.constant 0 : index
    %11 = vector.load %arg3[%c0_6, %c0_7] : memref<128x128xbf16, #tpu.memory_space<vmem>>, vector<128x128xbf16>
    %cst_8 = arith.constant dense<0.000000e+00> : vector<8x128xf32>
    %12 = tpu.matmul %10, %11, %cst_8 {dimension_numbers = #tpu.dot_dimension_numbers<[1], [0], [0], [1], [0, 0, 1, 1], [], []>} : vector<8x128xbf16>, vector<128x128xbf16>, vector<8x128xf32> -> vector<8x128xf32>
    %13 = vector.extract_strided_slice %0 {offsets = [1, 0], sizes = [1, 128], strides = [1, 1]} : vector<4x128xf32> to vector<1x128xf32>
    %14 = vector.broadcast %13 : vector<1x128xf32> to vector<8x128xf32>
    %15 = arith.addf %12, %14 : vector<8x128xf32>
    %cst_9 = arith.constant 0.000000e+00 : f32
    %16 = vector.broadcast %cst_9 : f32 to vector<8x128xf32>
    %17 = arith.maximumf %15, %16 : vector<8x128xf32>
    %18 = arith.truncf %17 : vector<8x128xf32> to vector<8x128xbf16>
    %c0_10 = arith.constant 0 : index
    %c0_11 = arith.constant 0 : index
    %19 = vector.load %arg4[%c0_10, %c0_11] : memref<128x128xbf16, #tpu.memory_space<vmem>>, vector<128x128xbf16>
    %cst_12 = arith.constant dense<0.000000e+00> : vector<8x128xf32>
    %20 = tpu.matmul %18, %19, %cst_12 {dimension_numbers = #tpu.dot_dimension_numbers<[1], [0], [0], [1], [0, 0, 1, 1], [], []>} : vector<8x128xbf16>, vector<128x128xbf16>, vector<8x128xf32> -> vector<8x128xf32>
    %21 = vector.extract_strided_slice %0 {offsets = [2, 0], sizes = [1, 128], strides = [1, 1]} : vector<4x128xf32> to vector<1x128xf32>
    %22 = vector.broadcast %21 : vector<1x128xf32> to vector<8x128xf32>
    %23 = arith.addf %20, %22 : vector<8x128xf32>
    %cst_13 = arith.constant 0.000000e+00 : f32
    %24 = vector.broadcast %cst_13 : f32 to vector<8x128xf32>
    %25 = arith.maximumf %23, %24 : vector<8x128xf32>
    %26 = arith.truncf %25 : vector<8x128xf32> to vector<8x128xbf16>
    %c0_14 = arith.constant 0 : index
    %c0_15 = arith.constant 0 : index
    %27 = vector.load %arg5[%c0_14, %c0_15] : memref<128x128xbf16, #tpu.memory_space<vmem>>, vector<128x128xbf16>
    %cst_16 = arith.constant dense<0.000000e+00> : vector<8x128xf32>
    %28 = tpu.matmul %26, %27, %cst_16 {dimension_numbers = #tpu.dot_dimension_numbers<[1], [0], [0], [1], [0, 0, 1, 1], [], []>} : vector<8x128xbf16>, vector<128x128xbf16>, vector<8x128xf32> -> vector<8x128xf32>
    %29 = vector.extract_strided_slice %0 {offsets = [3, 0], sizes = [1, 128], strides = [1, 1]} : vector<4x128xf32> to vector<1x128xf32>
    %30 = vector.broadcast %29 : vector<1x128xf32> to vector<8x128xf32>
    %31 = arith.addf %28, %30 : vector<8x128xf32>
    %c0_17 = arith.constant 0 : index
    %c0_18 = arith.constant 0 : index
    %32 = vector.load %arg7[%c0_17, %c0_18] : memref<8x128xf32, #tpu.memory_space<vmem>>, vector<8x128xf32>
    tpu.vector_store %arg7[%c0_17, %c0_18], %31 {strides = array<i32>} : memref<8x128xf32, #tpu.memory_space<vmem>>, vector<8x128xf32>,
    return
  }
  func.func @transform_0(%arg0: i32) -> (i32, i32) {
    %c0_i32 = arith.constant 0 : i32
    %c0_i32_0 = arith.constant 0 : i32
    return %arg0, %c0_i32 : i32, i32
  }
  func.func @transform_1(%arg0: i32) -> (i32, i32) {
    %c0_i32 = arith.constant 0 : i32
    %c0_i32_0 = arith.constant 0 : i32
    %c0_i32_1 = arith.constant 0 : i32
    return %c0_i32, %c0_i32_0 : i32, i32
  }
  func.func @transform_2(%arg0: i32) -> (i32, i32) {
    %c0_i32 = arith.constant 0 : i32
    %c0_i32_0 = arith.constant 0 : i32
    %c0_i32_1 = arith.constant 0 : i32
    return %c0_i32, %c0_i32_0 : i32, i32
  }
  func.func @transform_3(%arg0: i32) -> (i32, i32) {
    %c0_i32 = arith.constant 0 : i32
    %c0_i32_0 = arith.constant 0 : i32
    %c0_i32_1 = arith.constant 0 : i32
    return %c0_i32, %c0_i32_0 : i32, i32
  }
  func.func @transform_4(%arg0: i32) -> (i32, i32) {
    %c0_i32 = arith.constant 0 : i32
    %c0_i32_0 = arith.constant 0 : i32
    %c0_i32_1 = arith.constant 0 : i32
    return %c0_i32, %c0_i32_0 : i32, i32
  }
  func.func @transform_5(%arg0: i32) -> (i32, i32) {
    %c0_i32 = arith.constant 0 : i32
    %c0_i32_0 = arith.constant 0 : i32
    %c0_i32_1 = arith.constant 0 : i32
    return %c0_i32, %c0_i32_0 : i32, i32
  }
  func.func @transform_6(%arg0: i32) -> (i32, i32) {
    %c0_i32 = arith.constant 0 : i32
    %c0_i32_0 = arith.constant 0 : i32
    return %arg0, %c0_i32 : i32, i32
  }
}

</mosaic_0001>

<llo_original>
// kernel: tpu_custom_call.1
$region0: #{tpu_custom_call.1}
  #allocation0 [shape = 'u32[]', space=smem, size = 0x4, offset = 0x4, fixed_abs, tag = 'smem constant byte address 0x4 - core index']
  #allocation1 [shape = 'u32[144,128]{1,0:T(1,128)}', space=vmem, size = 0x12000, scoped, tag = 'internal scratch']
  %s0 = inlined_call_operand.hbm [shape: f32[8,64], index: 0, kind: input, shape index: {}]
  %s1 = inlined_call_operand.hbm [shape: bf16[64,128], index: 1, kind: input, shape index: {}]
  %s2 = inlined_call_operand.hbm [shape: bf16[128,128], index: 2, kind: input, shape index: {}]
  %s3 = inlined_call_operand.hbm [shape: bf16[128,128], index: 3, kind: input, shape index: {}]
  %s4 = inlined_call_operand.hbm [shape: bf16[128,128], index: 4, kind: input, shape index: {}]
  %s5 = inlined_call_operand.vmem [shape: f32[4,128], index: 5, kind: input, shape index: {}]
  %s6 = inlined_call_operand.hbm [shape: f32[8,128], index: 6, kind: output, shape index: {}]
  %s7 = sld [smem:[#allocation0]]
  $region54: #{tpu_custom_call.1} parent=0
    _
  %s9 = ssub.s32 1, %s7
  %s10 = scalar_select 0, %s9, %s7
  $region1: #{tpu_custom_call.1} parent=0
    #allocation2 [shape = 'u8[4096]{0}', space=vmem, size = 0x1000, scoped, tag = 'input window, operand 0, single buffered']
    #allocation3 [shape = 's32[1]{0}', space=sflag, size = 0x4, scoped, tag = 'scoped memory for tpu_custom_call.1']
    #allocation4 [shape = 's32[1]{0}', space=sflag, size = 0x4, scoped, tag = 'scoped memory for tpu_custom_call.1']
    #allocation5 [shape = 'u8[16384]{0}', space=vmem, size = 0x4000, scoped, tag = 'input window, operand 1, single buffered']
    #allocation6 [shape = 's32[1]{0}', space=sflag, size = 0x4, scoped, tag = 'scoped memory for tpu_custom_call.1']
    #allocation7 [shape = 'u8[32768]{0}', space=vmem, size = 0x8000, scoped, tag = 'input window, operand 2, single buffered']
    #allocation8 [shape = 'u8[32768]{0}', space=vmem, size = 0x8000, scoped, tag = 'input window, operand 3, single buffered']
    #allocation9 [shape = 's32[1]{0}', space=sflag, size = 0x4, scoped, tag = 'scoped memory for tpu_custom_call.1']
    #allocation10 [shape = 'u8[32768]{0}', space=vmem, size = 0x8000, scoped, tag = 'input window, operand 4, single buffered']
    #allocation11 [shape = 'u8[4096]{0}', space=vmem, size = 0x1000, scoped, tag = 'output window, operand 0, single buffered']
    %11 = vsyncpa [#allocation3], 0
    %12 = vsyncpa [#allocation6], 0
    %13 = vsyncpa [#allocation9], 0
    %14 = vsyncpa [#allocation4], 0
    // Predicated region
    $region2: #{tpu_custom_call.1} parent=1 // pred_check
      _
    $region3: #{tpu_custom_call.1} parent=1 // pred_check_branch
      %16 = sbr.rel (0) target = $region5
    $region4: #{tpu_custom_call.1} parent=1 // pred_region
      %s18 = ssub.s32 128, 128
      %19 = vsyncadd [#allocation3], %s18
      %s21 = sshll.u32 [#allocation2], 4
      %s22 = int_to_ptr.vmem [resolvable:$true] %s21
      %24 = dma.hbm_to_vmem [thread:$0]  %s0, 128, %s22, [#allocation3]
    $region5: #{tpu_custom_call.1} parent=1 // pred_fallthru
      _
    // Predicated region
    $region6: #{tpu_custom_call.1} parent=1 // pred_check
      _
    $region7: #{tpu_custom_call.1} parent=1 // pred_check_branch
      %26 = sbr.rel (0) target = $region9
    $region8: #{tpu_custom_call.1} parent=1 // pred_region
      %s28 = ssub.s32 512, 512
      %29 = vsyncadd [#allocation6], %s28
      %s30 = sshll.u32 [#allocation5], 4
      %s31 = int_to_ptr.vmem [resolvable:$true] %s30
      %36 = dma.hbm_to_vmem [thread:$0]  %s1, 512, %s31, [#allocation6], 64, 64, 4
    $region9: #{tpu_custom_call.1} parent=1 // pred_fallthru
      _
    // Predicated region
    $region10: #{tpu_custom_call.1} parent=1 // pred_check
      _
    $region11: #{tpu_custom_call.1} parent=1 // pred_check_branch
      %38 = sbr.rel (0) target = $region13
    $region12: #{tpu_custom_call.1} parent=1 // pred_region
      %s40 = ssub.s32 1024, 1024
      %41 = vsyncadd [#allocation6], %s40
      %s42 = sshll.u32 [#allocation7], 4
      %s43 = int_to_ptr.vmem [resolvable:$true] %s42
      %48 = dma.hbm_to_vmem [thread:$0]  %s2, 1024, %s43, [#allocation6], 64, 64, 4
    $region13: #{tpu_custom_call.1} parent=1 // pred_fallthru
      _
    // Predicated region
    $region14: #{tpu_custom_call.1} parent=1 // pred_check
      _
    $region15: #{tpu_custom_call.1} parent=1 // pred_check_branch
      %50 = sbr.rel (0) target = $region17
    $region16: #{tpu_custom_call.1} parent=1 // pred_region
      %s52 = ssub.s32 1024, 1024
      %53 = vsyncadd [#allocation9], %s52
      %s54 = sshll.u32 [#allocation8], 4
      %s55 = int_to_ptr.vmem [resolvable:$true] %s54
      %60 = dma.hbm_to_vmem [thread:$0]  %s3, 1024, %s55, [#allocation9], 64, 64, 4
    $region17: #{tpu_custom_call.1} parent=1 // pred_fallthru
      _
    // Predicated region
    $region18: #{tpu_custom_call.1} parent=1 // pred_check
      _
    $region19: #{tpu_custom_call.1} parent=1 // pred_check_branch
      %62 = sbr.rel (0) target = $region21
    $region20: #{tpu_custom_call.1} parent=1 // pred_region
      %s64 = ssub.s32 1024, 1024
      %65 = vsyncadd [#allocation9], %s64
      %s66 = sshll.u32 [#allocation10], 4
      %s67 = int_to_ptr.vmem [resolvable:$true] %s66
      %72 = dma.hbm_to_vmem [thread:$0]  %s4, 1024, %s67, [#allocation9], 64, 64, 4
    $region21: #{tpu_custom_call.1} parent=1 // pred_fallthru
      _
    // Predicated region
    $region22: #{tpu_custom_call.1} parent=1 // pred_check
      _
    $region23: #{tpu_custom_call.1} parent=1 // pred_check_branch
      %74 = sbr.rel (0) target = $region25
    $region24: #{tpu_custom_call.1} parent=1 // pred_region
      _
    $region25: #{tpu_custom_call.1} parent=1 // pred_fallthru
      _
    // Predicated region
    $region26: #{tpu_custom_call.1} parent=1 // pred_check
      _
    $region27: #{tpu_custom_call.1} parent=1 // pred_check_branch
      %76 = sbr.rel (0) target = $region29
    $region28: #{tpu_custom_call.1} parent=1 // pred_region
      %77 = dma.done [#allocation3], 128
    $region29: #{tpu_custom_call.1} parent=1 // pred_fallthru
      _
    // Predicated region
    $region30: #{tpu_custom_call.1} parent=1 // pred_check
      _
    $region31: #{tpu_custom_call.1} parent=1 // pred_check_branch
      %79 = sbr.rel (0) target = $region33
    $region32: #{tpu_custom_call.1} parent=1 // pred_region
      %80 = dma.done [#allocation6], 512
    $region33: #{tpu_custom_call.1} parent=1 // pred_fallthru
      _
    // Predicated region
    $region34: #{tpu_custom_call.1} parent=1 // pred_check
      _
    $region35: #{tpu_custom_call.1} parent=1 // pred_check_branch
      %82 = sbr.rel (0) target = $region37
    $region36: #{tpu_custom_call.1} parent=1 // pred_region
      %83 = dma.done [#allocation6], 1024
    $region37: #{tpu_custom_call.1} parent=1 // pred_fallthru
      _
    // Predicated region
    $region38: #{tpu_custom_call.1} parent=1 // pred_check
      _
    $region39: #{tpu_custom_call.1} parent=1 // pred_check_branch
      %85 = sbr.rel (0) target = $region41
    $region40: #{tpu_custom_call.1} parent=1 // pred_region
      %86 = dma.done [#allocation9], 1024
    $region41: #{tpu_custom_call.1} parent=1 // pred_fallthru
      _
    // Predicated region
    $region42: #{tpu_custom_call.1} parent=1 // pred_check
      _
    $region43: #{tpu_custom_call.1} parent=1 // pred_check_branch
      %88 = sbr.rel (0) target = $region45
    $region44: #{tpu_custom_call.1} parent=1 // pred_region
      %89 = dma.done [#allocation9], 1024
    $region45: #{tpu_custom_call.1} parent=1 // pred_fallthru
      _
    %v91 = vld [vmem:[%s5] sm:$0xf]
    %v92 = vld [vmem:[#allocation2] sm:$0xff]
    %v93 = vpack.c.bf16 %v92, %v92
    %v94 = vld [vmem:[#allocation5] sm:$0xf]
    %v95 = vld [vmem:[#allocation5 + $0x4] sm:$0xf]
    %v96 = vld [vmem:[#allocation5 + $0x8] sm:$0xf]
    %v97 = vld [vmem:[#allocation5 + $0xc] sm:$0xf]
    %v98 = vld [vmem:[#allocation5 + $0x10] sm:$0xf]
    %v99 = vld [vmem:[#allocation5 + $0x14] sm:$0xf]
    %v100 = vld [vmem:[#allocation5 + $0x18] sm:$0xf]
    %v101 = vld [vmem:[#allocation5 + $0x1c] sm:$0xf]
    %v102 = vlaneseq
    %v103 = vshrl.u32 %v102, 7
    %v104 = vsub.s32 0, %v103
    %v105 = vrot.slane %v91, %v104
    %v114 = vunpack.c.l.b16 %v94
    %v115 = vunpack.c.l.b16 %v95
    %v116 = vunpack.c.l.b16 %v96
    %v117 = vunpack.c.l.b16 %v97
    %v118 = vunpack.c.l.b16 %v98
    %v119 = vunpack.c.l.b16 %v99
    %v120 = vunpack.c.l.b16 %v100
    %v121 = vunpack.c.l.b16 %v101
    %v122 = vpack.c.b16 %v115, %v114
    %v123 = vpack.c.b16 %v117, %v116
    %v124 = vpack.c.b16 %v119, %v118
    %v125 = vpack.c.b16 %v121, %v120
    %vm130 = vcmask 523264
    %v132 = vsel %vm130, %v93, 0
    %134 = vmatprep.subr.bf16.mxu0 0
    %135 = vmatpush1.bf16.msra.mxu0 %v122
    %136 = vmatprep.subr.bf16.mxu0 0
    %137 = vmatpush1.bf16.msra.mxu0 %v123
    %138 = vmatprep.subr.bf16.mxu0 0
    %139 = vmatpush1.bf16.msra.mxu0 %v124
    %140 = vmatprep.subr.bf16.mxu0 0
    %141 = vmatpush1.bf16.msra.mxu0 %v125
    %142 = vmatprep.subr.bf16.mxu0 0
    %143 = vmatpush1.bf16.msra.mxu0 0
    %144 = vmatprep.subr.bf16.mxu0 0
    %145 = vmatpush1.bf16.msra.mxu0 0
    %146 = vmatprep.subr.bf16.mxu0 0
    %147 = vmatpush1.bf16.msra.mxu0 0
    %148 = vmatprep.subr.bf16.mxu0 0
    %149 = vmatpush1.bf16.msra.mxu0 0
    %150 = vmatprep.subr.bf16.mxu0 0
    %151 = vmatpush1.bf16.msra.mxu0 0
    %152 = vmatprep.subr.bf16.mxu0 0
    %153 = vmatpush1.bf16.msra.mxu0 0
    %154 = vmatprep.subr.bf16.mxu0 0
    %155 = vmatpush1.bf16.msra.mxu0 0
    %156 = vmatprep.subr.bf16.mxu0 0
    %157 = vmatpush1.bf16.msra.mxu0 0
    %158 = vmatprep.subr.bf16.mxu0 0
    %159 = vmatpush1.bf16.msra.mxu0 0
    %160 = vmatprep.subr.bf16.mxu0 0
    %161 = vmatpush1.bf16.msra.mxu0 0
    %162 = vmatprep.subr.bf16.mxu0 0
    %163 = vmatpush1.bf16.msra.mxu0 0
    %164 = vmatprep.subr.bf16.mxu0 0
    %165 = vmatpush1.bf16.msra.mxu0 0
    %166 = vmatprep.mubr.bf16.mxu0 0
    %167 = vmatmul.mubr.bf16.gmra.mrb[0].mxu0 %v132
    %v168 = vpop.f32.mrb[0].mxu0
    %v169 = vadd.f32 %v105, %v168
    %v170 = vpop.f32.mrb[0].mxu0
    %v171 = vpop.f32.mrb[0].mxu0
    %v172 = vpop.f32.mrb[0].mxu0
    %173 = vdwg.mxu0
    %v174 = vmax.f32 %v169, 0.0
    %v175 = vpack.c.bf16 %v174, %v174
    %v176 = vld [vmem:[#allocation7] sm:$0xf]
    %v177 = vld [vmem:[#allocation7 + $0x4] sm:$0xf]
    %v178 = vld [vmem:[#allocation7 + $0x8] sm:$0xf]
    %v179 = vld [vmem:[#allocation7 + $0xc] sm:$0xf]
    %v180 = vld [vmem:[#allocation7 + $0x10] sm:$0xf]
    %v181 = vld [vmem:[#allocation7 + $0x14] sm:$0xf]
    %v182 = vld [vmem:[#allocation7 + $0x18] sm:$0xf]
    %v183 = vld [vmem:[#allocation7 + $0x1c] sm:$0xf]
    %v184 = vld [vmem:[#allocation7 + $0x20] sm:$0xf]
    %v185 = vld [vmem:[#allocation7 + $0x24] sm:$0xf]
    %v186 = vld [vmem:[#allocation7 + $0x28] sm:$0xf]
    %v187 = vld [vmem:[#allocation7 + $0x2c] sm:$0xf]
    %v188 = vld [vmem:[#allocation7 + $0x30] sm:$0xf]
    %v189 = vld [vmem:[#allocation7 + $0x34] sm:$0xf]
    %v190 = vld [vmem:[#allocation7 + $0x38] sm:$0xf]
    %v191 = vld [vmem:[#allocation7 + $0x3c] sm:$0xf]
    %v192 = vlaneseq
    %v193 = vshrl.u32 %v192, 7
    %v194 = vsub.s32 1, %v193
    %v195 = vrot.slane %v91, %v194
    %v212 = vunpack.c.l.b16 %v176
    %v213 = vunpack.c.l.b16 %v177
    %v214 = vunpack.c.l.b16 %v178
    %v215 = vunpack.c.l.b16 %v179
    %v216 = vunpack.c.l.b16 %v180
    %v217 = vunpack.c.l.b16 %v181
    %v218 = vunpack.c.l.b16 %v182
    %v219 = vunpack.c.l.b16 %v183
    %v220 = vunpack.c.l.b16 %v184
    %v221 = vunpack.c.l.b16 %v185
    %v222 = vunpack.c.l.b16 %v186
    %v223 = vunpack.c.l.b16 %v187
    %v224 = vunpack.c.l.b16 %v188
    %v225 = vunpack.c.l.b16 %v189
    %v226 = vunpack.c.l.b16 %v190
    %v227 = vunpack.c.l.b16 %v191
    %v228 = vpack.c.b16 %v213, %v212
    %v229 = vpack.c.b16 %v215, %v214
    %v230 = vpack.c.b16 %v217, %v216
    %v231 = vpack.c.b16 %v219, %v218
    %v232 = vpack.c.b16 %v221, %v220
    %v233 = vpack.c.b16 %v223, %v222
    %v234 = vpack.c.b16 %v225, %v224
    %v235 = vpack.c.b16 %v227, %v226
    %244 = vmatprep.subr.bf16.mxu0 0
    %245 = vmatpush1.bf16.msra.mxu0 %v228
    %246 = vmatprep.subr.bf16.mxu0 0
    %247 = vmatpush1.bf16.msra.mxu0 %v229
    %248 = vmatprep.subr.bf16.mxu0 0
    %249 = vmatpush1.bf16.msra.mxu0 %v230
    %250 = vmatprep.subr.bf16.mxu0 0
    %251 = vmatpush1.bf16.msra.mxu0 %v231
    %252 = vmatprep.subr.bf16.mxu0 0
    %253 = vmatpush1.bf16.msra.mxu0 %v232
    %254 = vmatprep.subr.bf16.mxu0 0
    %255 = vmatpush1.bf16.msra.mxu0 %v233
    %256 = vmatprep.subr.bf16.mxu0 0
    %257 = vmatpush1.bf16.msra.mxu0 %v234
    %258 = vmatprep.subr.bf16.mxu0 0
    %259 = vmatpush1.bf16.msra.mxu0 %v235
    %260 = vmatprep.subr.bf16.mxu0 0
    %261 = vmatpush1.bf16.msra.mxu0 0
    %262 = vmatprep.subr.bf16.mxu0 0
    %263 = vmatpush1.bf16.msra.mxu0 0
    %264 = vmatprep.subr.bf16.mxu0 0
    %265 = vmatpush1.bf16.msra.mxu0 0
    %266 = vmatprep.subr.bf16.mxu0 0
    %267 = vmatpush1.bf16.msra.mxu0 0
    %268 = vmatprep.subr.bf16.mxu0 0
    %269 = vmatpush1.bf16.msra.mxu0 0
    %270 = vmatprep.subr.bf16.mxu0 0
    %271 = vmatpush1.bf16.msra.mxu0 0
    %272 = vmatprep.subr.bf16.mxu0 0
    %273 = vmatpush1.bf16.msra.mxu0 0
    %274 = vmatprep.subr.bf16.mxu0 0
    %275 = vmatpush1.bf16.msra.mxu0 0
    %276 = vmatprep.mubr.bf16.mxu0 0
    %277 = vmatmul.mubr.bf16.gmra.mrb[0].mxu0 %v175
    %v278 = vpop.f32.mrb[0].mxu0
    %v279 = vadd.f32 %v195, %v278
    %v280 = vpop.f32.mrb[0].mxu0
    %v281 = vpop.f32.mrb[0].mxu0
    %v282 = vpop.f32.mrb[0].mxu0
    %283 = vdwg.mxu0
    %v284 = vmax.f32 %v279, 0.0
    %v285 = vpack.c.bf16 %v284, %v284
    %v286 = vld [vmem:[#allocation8] sm:$0xf]
    %v287 = vld [vmem:[#allocation8 + $0x4] sm:$0xf]
    %v288 = vld [vmem:[#allocation8 + $0x8] sm:$0xf]
    %v289 = vld [vmem:[#allocation8 + $0xc] sm:$0xf]
    %v290 = vld [vmem:[#allocation8 + $0x10] sm:$0xf]
    %v291 = vld [vmem:[#allocation8 + $0x14] sm:$0xf]
    %v292 = vld [vmem:[#allocation8 + $0x18] sm:$0xf]
    %v293 = vld [vmem:[#allocation8 + $0x1c] sm:$0xf]
    %v294 = vld [vmem:[#allocation8 + $0x20] sm:$0xf]
    %v295 = vld [vmem:[#allocation8 + $0x24] sm:$0xf]
    %v296 = vld [vmem:[#allocation8 + $0x28] sm:$0xf]
    %v297 = vld [vmem:[#allocation8 + $0x2c] sm:$0xf]
    %v298 = vld [vmem:[#allocation8 + $0x30] sm:$0xf]
    %v299 = vld [vmem:[#allocation8 + $0x34] sm:$0xf]
    %v300 = vld [vmem:[#allocation8 + $0x38] sm:$0xf]
    %v301 = vld [vmem:[#allocation8 + $0x3c] sm:$0xf]
    %v302 = vlaneseq
    %v303 = vshrl.u32 %v302, 7
    %v304 = vsub.s32 2, %v303
    %v305 = vrot.slane %v91, %v304
    %v322 = vunpack.c.l.b16 %v286
    %v323 = vunpack.c.l.b16 %v287
    %v324 = vunpack.c.l.b16 %v288
    %v325 = vunpack.c.l.b16 %v289
    %v326 = vunpack.c.l.b16 %v290
    %v327 = vunpack.c.l.b16 %v291
    %v328 = vunpack.c.l.b16 %v292
    %v329 = vunpack.c.l.b16 %v293
    %v330 = vunpack.c.l.b16 %v294
    %v331 = vunpack.c.l.b16 %v295
    %v332 = vunpack.c.l.b16 %v296
    %v333 = vunpack.c.l.b16 %v297
    %v334 = vunpack.c.l.b16 %v298
    %v335 = vunpack.c.l.b16 %v299
    %v336 = vunpack.c.l.b16 %v300
    %v337 = vunpack.c.l.b16 %v301
    %v338 = vpack.c.b16 %v323, %v322
    %v339 = vpack.c.b16 %v325, %v324
    %v340 = vpack.c.b16 %v327, %v326
    %v341 = vpack.c.b16 %v329, %v328
    %v342 = vpack.c.b16 %v331, %v330
    %v343 = vpack.c.b16 %v333, %v332
    %v344 = vpack.c.b16 %v335, %v334
    %v345 = vpack.c.b16 %v337, %v336
    %354 = vmatprep.subr.bf16.mxu0 0
    %355 = vmatpush1.bf16.msra.mxu0 %v338
    %356 = vmatprep.subr.bf16.mxu0 0
    %357 = vmatpush1.bf16.msra.mxu0 %v339
    %358 = vmatprep.subr.bf16.mxu0 0
    %359 = vmatpush1.bf16.msra.mxu0 %v340
    %360 = vmatprep.subr.bf16.mxu0 0
    %361 = vmatpush1.bf16.msra.mxu0 %v341
    %362 = vmatprep.subr.bf16.mxu0 0
    %363 = vmatpush1.bf16.msra.mxu0 %v342
    %364 = vmatprep.subr.bf16.mxu0 0
    %365 = vmatpush1.bf16.msra.mxu0 %v343
    %366 = vmatprep.subr.bf16.mxu0 0
    %367 = vmatpush1.bf16.msra.mxu0 %v344
    %368 = vmatprep.subr.bf16.mxu0 0
    %369 = vmatpush1.bf16.msra.mxu0 %v345
    %370 = vmatprep.subr.bf16.mxu0 0
    %371 = vmatpush1.bf16.msra.mxu0 0
    %372 = vmatprep.subr.bf16.mxu0 0
    %373 = vmatpush1.bf16.msra.mxu0 0
    %374 = vmatprep.subr.bf16.mxu0 0
    %375 = vmatpush1.bf16.msra.mxu0 0
    %376 = vmatprep.subr.bf16.mxu0 0
    %377 = vmatpush1.bf16.msra.mxu0 0
    %378 = vmatprep.subr.bf16.mxu0 0
    %379 = vmatpush1.bf16.msra.mxu0 0
    %380 = vmatprep.subr.bf16.mxu0 0
    %381 = vmatpush1.bf16.msra.mxu0 0
    %382 = vmatprep.subr.bf16.mxu0 0
    %383 = vmatpush1.bf16.msra.mxu0 0
    %384 = vmatprep.subr.bf16.mxu0 0
    %385 = vmatpush1.bf16.msra.mxu0 0
    %386 = vmatprep.mubr.bf16.mxu0 0
    %387 = vmatmul.mubr.bf16.gmra.mrb[0].mxu0 %v285
    %v388 = vpop.f32.mrb[0].mxu0
    %v389 = vadd.f32 %v305, %v388
    %v390 = vpop.f32.mrb[0].mxu0
    %v391 = vpop.f32.mrb[0].mxu0
    %v392 = vpop.f32.mrb[0].mxu0
    %393 = vdwg.mxu0
    %v394 = vmax.f32 %v389, 0.0
    %v395 = vpack.c.bf16 %v394, %v394
    %v396 = vld [vmem:[#allocation10] sm:$0xf]
    %v397 = vld [vmem:[#allocation10 + $0x4] sm:$0xf]
    %v398 = vld [vmem:[#allocation10 + $0x8] sm:$0xf]
    %v399 = vld [vmem:[#allocation10 + $0xc] sm:$0xf]
    %v400 = vld [vmem:[#allocation10 + $0x10] sm:$0xf]
    %v401 = vld [vmem:[#allocation10 + $0x14] sm:$0xf]
    %v402 = vld [vmem:[#allocation10 + $0x18] sm:$0xf]
    %v403 = vld [vmem:[#allocation10 + $0x1c] sm:$0xf]
    %v404 = vld [vmem:[#allocation10 + $0x20] sm:$0xf]
    %v405 = vld [vmem:[#allocation10 + $0x24] sm:$0xf]
    %v406 = vld [vmem:[#allocation10 + $0x28] sm:$0xf]
    %v407 = vld [vmem:[#allocation10 + $0x2c] sm:$0xf]
    %v408 = vld [vmem:[#allocation10 + $0x30] sm:$0xf]
    %v409 = vld [vmem:[#allocation10 + $0x34] sm:$0xf]
    %v410 = vld [vmem:[#allocation10 + $0x38] sm:$0xf]
    %v411 = vld [vmem:[#allocation10 + $0x3c] sm:$0xf]
    %v412 = vlaneseq
    %v413 = vshrl.u32 %v412, 7
    %v414 = vsub.s32 3, %v413
    %v415 = vrot.slane %v91, %v414
    %v432 = vunpack.c.l.b16 %v396
    %v433 = vunpack.c.l.b16 %v397
    %v434 = vunpack.c.l.b16 %v398
    %v435 = vunpack.c.l.b16 %v399
    %v436 = vunpack.c.l.b16 %v400
    %v437 = vunpack.c.l.b16 %v401
    %v438 = vunpack.c.l.b16 %v402
    %v439 = vunpack.c.l.b16 %v403
    %v440 = vunpack.c.l.b16 %v404
    %v441 = vunpack.c.l.b16 %v405
    %v442 = vunpack.c.l.b16 %v406
    %v443 = vunpack.c.l.b16 %v407
    %v444 = vunpack.c.l.b16 %v408
    %v445 = vunpack.c.l.b16 %v409
    %v446 = vunpack.c.l.b16 %v410
    %v447 = vunpack.c.l.b16 %v411
    %v448 = vpack.c.b16 %v433, %v432
    %v449 = vpack.c.b16 %v435, %v434
    %v450 = vpack.c.b16 %v437, %v436
    %v451 = vpack.c.b16 %v439, %v438
    %v452 = vpack.c.b16 %v441, %v440
    %v453 = vpack.c.b16 %v443, %v442
    %v454 = vpack.c.b16 %v445, %v444
    %v455 = vpack.c.b16 %v447, %v446
    %464 = vmatprep.subr.bf16.mxu0 0
    %465 = vmatpush1.bf16.msra.mxu0 %v448
    %466 = vmatprep.subr.bf16.mxu0 0
    %467 = vmatpush1.bf16.msra.mxu0 %v449
    %468 = vmatprep.subr.bf16.mxu0 0
    %469 = vmatpush1.bf16.msra.mxu0 %v450
    %470 = vmatprep.subr.bf16.mxu0 0
    %471 = vmatpush1.bf16.msra.mxu0 %v451
    %472 = vmatprep.subr.bf16.mxu0 0
    %473 = vmatpush1.bf16.msra.mxu0 %v452
    %474 = vmatprep.subr.bf16.mxu0 0
    %475 = vmatpush1.bf16.msra.mxu0 %v453
    %476 = vmatprep.subr.bf16.mxu0 0
    %477 = vmatpush1.bf16.msra.mxu0 %v454
    %478 = vmatprep.subr.bf16.mxu0 0
    %479 = vmatpush1.bf16.msra.mxu0 %v455
    %480 = vmatprep.subr.bf16.mxu0 0
    %481 = vmatpush1.bf16.msra.mxu0 0
    %482 = vmatprep.subr.bf16.mxu0 0
    %483 = vmatpush1.bf16.msra.mxu0 0
    %484 = vmatprep.subr.bf16.mxu0 0
    %485 = vmatpush1.bf16.msra.mxu0 0
    %486 = vmatprep.subr.bf16.mxu0 0
    %487 = vmatpush1.bf16.msra.mxu0 0
    %488 = vmatprep.subr.bf16.mxu0 0
    %489 = vmatpush1.bf16.msra.mxu0 0
    %490 = vmatprep.subr.bf16.mxu0 0
    %491 = vmatpush1.bf16.msra.mxu0 0
    %492 = vmatprep.subr.bf16.mxu0 0
    %493 = vmatpush1.bf16.msra.mxu0 0
    %494 = vmatprep.subr.bf16.mxu0 0
    %495 = vmatpush1.bf16.msra.mxu0 0
    %496 = vmatprep.mubr.bf16.mxu0 0
    %497 = vmatmul.mubr.bf16.gmra.mrb[0].mxu0 %v395
    %v498 = vpop.f32.mrb[0].mxu0
    %v499 = vadd.f32 %v415, %v498
    %v500 = vpop.f32.mrb[0].mxu0
    %v501 = vpop.f32.mrb[0].mxu0
    %v502 = vpop.f32.mrb[0].mxu0
    %503 = vdwg.mxu0
    %504 = vst [vmem:[#allocation11] sm:$0xff] %v499
    // Predicated region
    $region46: #{tpu_custom_call.1} parent=1 // pred_check
      _
    $region47: #{tpu_custom_call.1} parent=1 // pred_check_branch
      %506 = sbr.rel (0) target = $region49
    $region48: #{tpu_custom_call.1} parent=1 // pred_region
      %s508 = ssub.s32 128, 128
      %509 = vsyncadd [#allocation4], %s508
      %s511 = sshll.u32 [#allocation11], 4
      %s512 = int_to_ptr.vmem [resolvable:$true] %s511
      %514 = dma.vmem_to_hbm [thread:$0]  %s512, 128, %s6, [#allocation4]
    $region49: #{tpu_custom_call.1} parent=1 // pred_fallthru
      _
    // Predicated region
    $region50: #{tpu_custom_call.1} parent=1 // pred_check
      _
    $region51: #{tpu_custom_call.1} parent=1 // pred_check_branch
      %516 = sbr.rel (0) target = $region53
    $region52: #{tpu_custom_call.1} parent=1 // pred_region
      %517 = dma.done [#allocation4], 128
    $region53: #{tpu_custom_call.1} parent=1 // pred_fallthru
      _
    %518 = vsyncpa [#allocation3], 1
    %519 = vsyncpa [#allocation6], 1
    %520 = vsyncpa [#allocation9], 1
    %521 = vsyncpa [#allocation4], 1

</llo_original>
